<compile_context>
chip_gen: v6e
topology: v6e:2x2x1
jax: 0.10.0
libtpu: 0.0.40
codegen_flags: <defaults>
</compile_context>

<pallas_src>
import functools

import jax
import jax.numpy as jnp
from jax.experimental import pallas as pl
from jax.experimental.pallas import tpu as pltpu


def _round_up(x, m):
    return (x + m - 1) // m * m


# ----------------------------- Pallas kernel --------------------------------
def _encoder_kernel(x_ref, w_ref, b_ref, f_ref, acc_ref, *, inv_tokens):
    # Grid: (B tiles [parallel], nH tiles [arbitrary reduction -- last]).
    #   x_ref:   (tB, C, tnH, M)   raw-image block, M = ph*W (patch-row x width)
    #   w_ref:   (C, M, Ep)        expanded folded weight (see wrapper)
    #   b_ref:   (1, Ep)           fc bias (lane-padded)
    #   f_ref:   (tB, Ep)          output features (lane-dense, padded)
    #   acc_ref: (tB, C, M) f32    pooled-pixel accumulator (VMEM scratch)
    h = pl.program_id(1)

    @pl.when(h == 0)
    def _():
        acc_ref[...] = jnp.zeros_like(acc_ref)

    # Pool-first: running f32 sum over the patch-row (nH) blocks.  Pure per-vreg
    # add/reduce work per step, hidden under the image DMA; no (B, L, D)
    # intermediate is ever materialised.
    acc_ref[...] += jnp.sum(x_ref[...].astype(jnp.float32), axis=2)

    @pl.when(h == pl.num_programs(1) - 1)
    def _():
        pooled = acc_ref[...] * jnp.float32(inv_tokens)          # (tB, C, M)
        f = jnp.zeros(f_ref.shape, jnp.float32)
        # C tiny matmuls, once per output tile (MXU, f32 accumulate).  The
        # per-pixel (dy, dx) bookkeeping is entirely inside w_ref.
        for c in range(pooled.shape[1]):
            f = f + jnp.dot(pooled[:, c, :].astype(w_ref.dtype), w_ref[c],
                            preferred_element_type=jnp.float32)
        f_ref[...] = (f + b_ref[...].astype(jnp.float32)).astype(f_ref.dtype)


# --------------------------- tiling / VMEM policy ----------------------------
def _vmem_capacity_bytes():
    try:
        cap = getattr(pltpu.get_tpu_info(), "vmem_capacity_bytes", None)
        if cap:
            return int(cap)
    except Exception:
        pass
    return 64 * 1024 * 1024          # conservative default (v7x per-core VMEM)


def _pick_tiles(B, C, nH, M, in_itemsize, Ep, block_budget):
    """Largest legal (tB, tnH) whose double-buffered block fits the VMEM budget.

    Legality: block minor dims must be a multiple of 8 / 128 or the full extent,
    which constrains tB (output block) and tnH (input block).  Once a streamed
    block is >= ~4 MiB (past the per-step-overhead knee), prefer >= 2 blocks on
    the parallel B axis so both v7x TensorCores get work.
    """
    Mp = _round_up(M, 128)

    def need(tb, th):                 # 2x-buffered input + scratch + 2x output
        blk = 2 * tb * C * _round_up(th, 8) * Mp * in_itemsize
        acc = tb * _round_up(C, 8) * Mp * 4
        out = 2 * _round_up(tb, 8) * Ep * 4
        return blk + acc + out

    tb_cands = [d for d in range(1, B + 1) if B % d == 0 and (d % 8 == 0 or d == B)]
    th_cands = [d for d in range(1, nH + 1) if nH % d == 0 and (d % 8 == 0 or d == nH)]
    cands = [(tb, th) for tb in tb_cands for th in th_cands]
    fitting = [c for c in cands if need(*c) <= block_budget]
    if not fitting:                   # degenerate budget: take the smallest block
        fitting = [min(cands, key=lambda c: need(*c))]

    four_mib = 4 << 20

    def score(cfg):
        tb, th = cfg
        stream = tb * C * th * M * in_itemsize
        return (min(stream, four_mib),
                (B // tb) >= 2 and stream >= four_mib,
                stream)

    return max(fitting, key=score)


# ------------------------------- wrapper -------------------------------------
def encoder_cnn_forward(images, w_emb, w_fc, b_fc, *, patch_size=4):
    """EncoderCNN.forward.  images: (B, C, H, W) NCHW.  Returns (f, f).

    Streams the raw NCHW images (native dtype: feed bf16 images to halve the
    dominant HBM read), accumulates pooled-pixel sums in f32, and applies the
    folded, expanded (w_emb @ w_fc) weight once per batch tile.
    """
    B, C, H, W = images.shape
    ph = pw = patch_size
    assert H % ph == 0 and W % pw == 0, "image dims must be divisible by patch size"
    nH, nW = H // ph, W // pw
    L = nH * nW
    P = C * ph * pw
    assert w_emb.shape[0] == P, "w_emb rows must equal C*patch*patch"
    D = w_emb.shape[1]
    E = w_fc.shape[1]
    assert w_fc.shape[0] == D and b_fc.shape == (E,)

    M = ph * W                                  # merged (patch-row, width) axis

    # Free (dim-split, no transpose, no HBM copy) view of the images.
    x = images.reshape(B, C, nH, M)

    # Fold w_emb @ w_fc (drops one matmul and the Dp pad), pad E to lane-dense
    # Ep, and expand along the width axis so the column-within-patch index
    # lives entirely in the weight:
    #   w_exp[c, dy*W + w, e] = (w_emb @ w_fc)[c*ph*pw + dy*pw + (w % pw), e]
    Ep = _round_up(E, 128)
    w_comb = jnp.dot(w_emb, w_fc)                                    # (P, E)
    w_comb = jnp.zeros((P, Ep), w_comb.dtype).at[:, :E].set(w_comb)  # lane pad
    w_exp = w_comb.reshape(C, ph, pw, Ep)[:, :, jnp.arange(W) % pw, :]
    w_exp = w_exp.reshape(C, M, Ep)
    b_pad = jnp.zeros((1, Ep), b_fc.dtype).at[0, :E].set(b_fc)

    # Generation-aware VMEM budget and tile choice.
    in_itemsize = jnp.dtype(x.dtype).itemsize
    w_itemsize = jnp.dtype(w_exp.dtype).itemsize
    vmem_cap = _vmem_capacity_bytes()
    vmem_limit = int(max(16 << 20, min(int(vmem_cap * 0.8), vmem_cap - (8 << 20))))
    Mp = _round_up(M, 128)
    weight_bytes = 2 * C * Mp * Ep * w_itemsize + 2 * 8 * Ep * 4     # 2x-buffered
    block_budget = vmem_limit - weight_bytes - (4 << 20)             # compiler slack
    tB, tnH = _pick_tiles(B, C, nH, M, in_itemsize, Ep, block_budget)

    cost = pl.CostEstimate(
        flops=B * C * nH * M + 2 * B * C * M * Ep,
        transcendentals=0,
        bytes_accessed=(B * C * nH * M * in_itemsize
                        + C * M * Ep * w_itemsize + Ep * 4
                        + B * Ep * in_itemsize),
    )

    f_pad = pl.pallas_call(
        functools.partial(_encoder_kernel, inv_tokens=1.0 / L),
        out_shape=jax.ShapeDtypeStruct((B, Ep), images.dtype),
        grid=(B // tB, nH // tnH),
        in_specs=[
            pl.BlockSpec((tB, C, tnH, M), lambda b, h: (b, 0, h, 0)),
            pl.BlockSpec((C, M, Ep), lambda b, h: (0, 0, 0)),
            pl.BlockSpec((1, Ep), lambda b, h: (0, 0)),
        ],
        out_specs=pl.BlockSpec((tB, Ep), lambda b, h: (b, 0)),
        scratch_shapes=[pltpu.VMEM((tB, C, M), jnp.float32)],
        compiler_params=pltpu.CompilerParams(
            dimension_semantics=("parallel", "arbitrary"),
            vmem_limit_bytes=vmem_limit,
        ),
        cost_estimate=cost,
    )(x, w_exp, b_pad)

    f = f_pad[:, :E]
    # forward returns the same feature tensor twice: (f, f)
    return f, f


# ------------------------------ reference ------------------------------------
def encoder_cnn_ref(images, w_emb, w_fc, b_fc, *, patch_size=4):
    B, C, H, W = images.shape
    ph = pw = patch_size
    nH, nW = H // ph, W // pw
    tok = images.reshape(B, C, nH, ph, nW, pw)
    tok = jnp.transpose(tok, (0, 2, 4, 1, 3, 5)).reshape(B, nH * nW, C * ph * pw)
    x = jnp.einsum("blp,pd->bld", tok, w_emb)
    pooled = jnp.mean(x, axis=1)
    f = pooled @ w_fc + b_fc[None, :]
    return f, f


# -------------------------------- main ---------------------------------------
if __name__ == "__main__":
    key = jax.random.PRNGKey(0)
    k_img, k_emb, k_fc, k_b = jax.random.split(key, 4)

    # Small shapes consistent with the module:
    B, C, H, W = 2, 4, 16, 16     # images, NCHW
    patch = 4
    P = C * patch * patch         # 64  patch dim
    D = 32                        # swin_model.fc.in_features (embed_dim)
    E = 32                        # embed_size

    images = jax.random.normal(k_img, (B, C, H, W), dtype=jnp.float32)

    # Deterministic parameter init (uniform, PyTorch-Linear-like scaling).
    w_emb = jax.random.uniform(k_emb, (P, D), dtype=jnp.float32,
                               minval=-1.0, maxval=1.0) / jnp.sqrt(P)
    w_fc = jax.random.uniform(k_fc, (D, E), dtype=jnp.float32,
                              minval=-1.0, maxval=1.0) / jnp.sqrt(D)
    b_fc = jax.random.uniform(k_b, (E,), dtype=jnp.float32,
                              minval=-1.0, maxval=1.0) / jnp.sqrt(D)

    # f32 path (exact up to f32 reassociation of the folded weight).
    f0, f1 = encoder_cnn_forward(images, w_emb, w_fc, b_fc, patch_size=patch)
    jax.block_until_ready((f0, f1))

    r0, r1 = encoder_cnn_ref(images, w_emb, w_fc, b_fc, patch_size=patch)
    assert f0.shape == (B, E) and f1.shape == (B, E)
    assert jnp.allclose(f0, r0, atol=1e-4, rtol=1e-4)
    assert jnp.allclose(f0, f1)

    # bf16 image streaming (model-native precision): half the HBM bytes for the
    # dominant read; accumulation stays f32 in-kernel.
    g0, g1 = encoder_cnn_forward(images.astype(jnp.bfloat16), w_emb, w_fc, b_fc,
                                 patch_size=patch)
    jax.block_until_ready((g0, g1))
    assert jnp.allclose(g0.astype(jnp.float32), r0, atol=5e-2, rtol=5e-2)

    print("KERNEL_OK")
</pallas_src>

<mosaic_0001>
module attributes {stable_mosaic.version = 11 : i64} {
  func.func @_encoder_kernel(%arg0: i32, %arg1: i32, %arg2: memref<2x4x4x64xf32, #tpu.memory_space<vmem>>, %arg3: memref<4x64x128xf32, #tpu.memory_space<vmem>>, %arg4: memref<1x128xf32, #tpu.memory_space<vmem>>, %arg5: memref<2x128xf32, #tpu.memory_space<vmem>>, %arg6: memref<2x4x64xf32, #tpu.memory_space<vmem>>) attributes {dimension_semantics = [#tpu.dimension_semantics<parallel>, #tpu.dimension_semantics<arbitrary>], iteration_bounds = array<i64: 1, 1>, scalar_prefetch = 0 : i64, scratch_operands = 1 : i64, tpu.core_type = #tpu.core_type<tc>, window_params = [{transform_indices = @transform_0, window_bounds = array<i64: 2, 4, 4, 64>}, {pipeline_mode = #tpu.pipeline_mode<synchronous>, transform_indices = @transform_1, window_bounds = array<i64: 4, 64, 128>}, {pipeline_mode = #tpu.pipeline_mode<synchronous>, transform_indices = @transform_2, window_bounds = array<i64: 1, 128>}, {transform_indices = @transform_3, window_bounds = array<i64: 2, 128>}]} {
    %c0_i32 = arith.constant 0 : i32
    %0 = arith.cmpi eq, %arg1, %c0_i32 : i32
    %1 = arith.extui %0 : i1 to i32
    %c0_i32_0 = arith.constant 0 : i32
    %2 = arith.cmpi ne, %1, %c0_i32_0 : i32
    scf.if %2 {
      %cst_12 = arith.constant 0.000000e+00 : f32
      %11 = vector.broadcast %cst_12 : f32 to vector<2x4x64xf32>
      %c0_13 = arith.constant 0 : index
      %c0_14 = arith.constant 0 : index
      %c0_15 = arith.constant 0 : index
      %12 = vector.load %arg6[%c0_13, %c0_14, %c0_15] : memref<2x4x64xf32, #tpu.memory_space<vmem>>, vector<2x4x64xf32>
      tpu.vector_store %arg6[%c0_13, %c0_14, %c0_15], %11 {strides = array<i32>} : memref<2x4x64xf32, #tpu.memory_space<vmem>>, vector<2x4x64xf32>,
    } else {
    }
    %c0 = arith.constant 0 : index
    %c0_1 = arith.constant 0 : index
    %c0_2 = arith.constant 0 : index
    %3 = vector.load %arg6[%c0, %c0_1, %c0_2] : memref<2x4x64xf32, #tpu.memory_space<vmem>>, vector<2x4x64xf32>
    %c0_3 = arith.constant 0 : index
    %c0_4 = arith.constant 0 : index
    %c0_5 = arith.constant 0 : index
    %c0_6 = arith.constant 0 : index
    %4 = vector.load %arg2[%c0_3, %c0_4, %c0_5, %c0_6] : memref<2x4x4x64xf32, #tpu.memory_space<vmem>>, vector<2x4x4x64xf32>
    %cst = arith.constant dense<0.000000e+00> : vector<2x4x64xf32>
    %5 = vector.multi_reduction <add>, %4, %cst [2] : vector<2x4x4x64xf32> to vector<2x4x64xf32>
    %6 = arith.addf %3, %5 : vector<2x4x64xf32>
    %c0_7 = arith.constant 0 : index
    %c0_8 = arith.constant 0 : index
    %c0_9 = arith.constant 0 : index
    %7 = vector.load %arg6[%c0_7, %c0_8, %c0_9] : memref<2x4x64xf32, #tpu.memory_space<vmem>>, vector<2x4x64xf32>
    tpu.vector_store %arg6[%c0_7, %c0_8, %c0_9], %6 {strides = array<i32>} : memref<2x4x64xf32, #tpu.memory_space<vmem>>, vector<2x4x64xf32>,
    %c0_i32_10 = arith.constant 0 : i32
    %8 = arith.cmpi eq, %arg1, %c0_i32_10 : i32
    %9 = arith.extui %8 : i1 to i32
    %c0_i32_11 = arith.constant 0 : i32
    %10 = arith.cmpi ne, %9, %c0_i32_11 : i32
    scf.if %10 {
      %c0_12 = arith.constant 0 : index
      %c0_13 = arith.constant 0 : index
      %c0_14 = arith.constant 0 : index
      %11 = vector.load %arg6[%c0_12, %c0_13, %c0_14] : memref<2x4x64xf32, #tpu.memory_space<vmem>>, vector<2x4x64xf32>
      %cst_15 = arith.constant 6.250000e-02 : f32
      %12 = vector.broadcast %cst_15 : f32 to vector<2x4x64xf32>
      %13 = arith.mulf %11, %12 : vector<2x4x64xf32>
      %cst_16 = arith.constant 0.000000e+00 : f32
      %14 = vector.broadcast %cst_16 : f32 to vector<2x128xf32>
      %15 = vector.extract_strided_slice %13 {offsets = [0, 0, 0], sizes = [2, 1, 64], strides = [1, 1, 1]} : vector<2x4x64xf32> to vector<2x1x64xf32>
      %16 = vector.shape_cast %15 : vector<2x1x64xf32> to vector<2x64xf32>
      %c0_17 = arith.constant 0 : index
      %c0_18 = arith.constant 0 : index
      %c0_19 = arith.constant 0 : index
      %17 = vector.load %arg3[%c0_17, %c0_18, %c0_19] : memref<4x64x128xf32, #tpu.memory_space<vmem>>, vector<1x64x128xf32>
      %18 = vector.shape_cast %17 : vector<1x64x128xf32> to vector<64x128xf32>
      %cst_20 = arith.constant dense<0.000000e+00> : vector<2x128xf32>
      %19 = tpu.matmul %16, %18, %cst_20 {dimension_numbers = #tpu.dot_dimension_numbers<[1], [0], [0], [1], [0, 0, 1, 1], [], []>} : vector<2x64xf32>, vector<64x128xf32>, vector<2x128xf32> -> vector<2x128xf32>
      %20 = arith.addf %14, %19 : vector<2x128xf32>
      %21 = vector.extract_strided_slice %13 {offsets = [0, 1, 0], sizes = [2, 1, 64], strides = [1, 1, 1]} : vector<2x4x64xf32> to vector<2x1x64xf32>
      %22 = vector.shape_cast %21 : vector<2x1x64xf32> to vector<2x64xf32>
      %c1 = arith.constant 1 : index
      %c0_21 = arith.constant 0 : index
      %c0_22 = arith.constant 0 : index
      %23 = vector.load %arg3[%c1, %c0_21, %c0_22] : memref<4x64x128xf32, #tpu.memory_space<vmem>>, vector<1x64x128xf32>
      %24 = vector.shape_cast %23 : vector<1x64x128xf32> to vector<64x128xf32>
      %cst_23 = arith.constant dense<0.000000e+00> : vector<2x128xf32>
      %25 = tpu.matmul %22, %24, %cst_23 {dimension_numbers = #tpu.dot_dimension_numbers<[1], [0], [0], [1], [0, 0, 1, 1], [], []>} : vector<2x64xf32>, vector<64x128xf32>, vector<2x128xf32> -> vector<2x128xf32>
      %26 = arith.addf %20, %25 : vector<2x128xf32>
      %27 = vector.extract_strided_slice %13 {offsets = [0, 2, 0], sizes = [2, 1, 64], strides = [1, 1, 1]} : vector<2x4x64xf32> to vector<2x1x64xf32>
      %28 = vector.shape_cast %27 : vector<2x1x64xf32> to vector<2x64xf32>
      %c2 = arith.constant 2 : index
      %c0_24 = arith.constant 0 : index
      %c0_25 = arith.constant 0 : index
      %29 = vector.load %arg3[%c2, %c0_24, %c0_25] : memref<4x64x128xf32, #tpu.memory_space<vmem>>, vector<1x64x128xf32>
      %30 = vector.shape_cast %29 : vector<1x64x128xf32> to vector<64x128xf32>
      %cst_26 = arith.constant dense<0.000000e+00> : vector<2x128xf32>
      %31 = tpu.matmul %28, %30, %cst_26 {dimension_numbers = #tpu.dot_dimension_numbers<[1], [0], [0], [1], [0, 0, 1, 1], [], []>} : vector<2x64xf32>, vector<64x128xf32>, vector<2x128xf32> -> vector<2x128xf32>
      %32 = arith.addf %26, %31 : vector<2x128xf32>
      %33 = vector.extract_strided_slice %13 {offsets = [0, 3, 0], sizes = [2, 1, 64], strides = [1, 1, 1]} : vector<2x4x64xf32> to vector<2x1x64xf32>
      %34 = vector.shape_cast %33 : vector<2x1x64xf32> to vector<2x64xf32>
      %c3 = arith.constant 3 : index
      %c0_27 = arith.constant 0 : index
      %c0_28 = arith.constant 0 : index
      %35 = vector.load %arg3[%c3, %c0_27, %c0_28] : memref<4x64x128xf32, #tpu.memory_space<vmem>>, vector<1x64x128xf32>
      %36 = vector.shape_cast %35 : vector<1x64x128xf32> to vector<64x128xf32>
      %cst_29 = arith.constant dense<0.000000e+00> : vector<2x128xf32>
      %37 = tpu.matmul %34, %36, %cst_29 {dimension_numbers = #tpu.dot_dimension_numbers<[1], [0], [0], [1], [0, 0, 1, 1], [], []>} : vector<2x64xf32>, vector<64x128xf32>, vector<2x128xf32> -> vector<2x128xf32>
      %38 = arith.addf %32, %37 : vector<2x128xf32>
      %c0_30 = arith.constant 0 : index
      %c0_31 = arith.constant 0 : index
      %39 = vector.load %arg4[%c0_30, %c0_31] : memref<1x128xf32, #tpu.memory_space<vmem>>, vector<1x128xf32>
      %40 = vector.broadcast %39 : vector<1x128xf32> to vector<2x128xf32>
      %41 = arith.addf %38, %40 : vector<2x128xf32>
      %c0_32 = arith.constant 0 : index
      %c0_33 = arith.constant 0 : index
      %42 = vector.load %arg5[%c0_32, %c0_33] : memref<2x128xf32, #tpu.memory_space<vmem>>, vector<2x128xf32>
      tpu.vector_store %arg5[%c0_32, %c0_33], %41 {strides = array<i32>} : memref<2x128xf32, #tpu.memory_space<vmem>>, vector<2x128xf32>,
    } else {
    }
    return
  }
  func.func @transform_0(%arg0: i32, %arg1: i32) -> (i32, i32, i32, i32) {
    %c0_i32 = arith.constant 0 : i32
    %c0_i32_0 = arith.constant 0 : i32
    %c0_i32_1 = arith.constant 0 : i32
    return %arg0, %c0_i32, %arg1, %c0_i32_0 : i32, i32, i32, i32
  }
  func.func @transform_1(%arg0: i32, %arg1: i32) -> (i32, i32, i32) {
    %c0_i32 = arith.constant 0 : i32
    %c0_i32_0 = arith.constant 0 : i32
    %c0_i32_1 = arith.constant 0 : i32
    %c0_i32_2 = arith.constant 0 : i32
    return %c0_i32, %c0_i32_0, %c0_i32_1 : i32, i32, i32
  }
  func.func @transform_2(%arg0: i32, %arg1: i32) -> (i32, i32) {
    %c0_i32 = arith.constant 0 : i32
    %c0_i32_0 = arith.constant 0 : i32
    %c0_i32_1 = arith.constant 0 : i32
    return %c0_i32, %c0_i32_0 : i32, i32
  }
  func.func @transform_3(%arg0: i32, %arg1: i32) -> (i32, i32) {
    %c0_i32 = arith.constant 0 : i32
    %c0_i32_0 = arith.constant 0 : i32
    return %arg0, %c0_i32 : i32, i32
  }
}

</mosaic_0001>

<llo_original>
// kernel: tpu_custom_call.1
$region0: #{tpu_custom_call.1}
  #allocation0 [shape = 'u32[]', space=smem, size = 0x4, offset = 0x4, fixed_abs, tag = 'smem constant byte address 0x4 - core index']
  #allocation1 [shape = 'u32[144,128]{1,0:T(1,128)}', space=vmem, size = 0x12000, scoped, tag = 'internal scratch']
  #allocation2 [shape = 'f32[2,4,64]{2,1,0:T(4,128)}', space=vmem, size = 0x1000, scoped, tag = 'scratch operand']
  %s0 = inlined_call_operand.hbm [shape: f32[2,4,4,64], index: 0, kind: input, shape index: {}]
  %s1 = inlined_call_operand.hbm [shape: f32[4,64,128], index: 1, kind: input, shape index: {}]
  %s2 = inlined_call_operand.vmem [shape: f32[1,128], index: 2, kind: input, shape index: {}]
  %s3 = inlined_call_operand.hbm [shape: f32[2,128], index: 3, kind: output, shape index: {}]
  %s4 = sld [smem:[#allocation0]]
  $region38: #{tpu_custom_call.1} parent=0
    _
  %s6 = ssub.s32 1, %s4
  %s7 = scalar_select 0, %s6, %s4
  $region1: #{tpu_custom_call.1} parent=0
    #allocation3 [shape = 'u8[16384]{0}', space=vmem, size = 0x4000, scoped, tag = 'input window, operand 0, single buffered']
    #allocation4 [shape = 's32[1]{0}', space=sflag, size = 0x4, scoped, tag = 'scoped memory for tpu_custom_call.1']
    #allocation5 [shape = 's32[1]{0}', space=sflag, size = 0x4, scoped, tag = 'scoped memory for tpu_custom_call.1']
    #allocation6 [shape = 'u8[131072]{0}', space=vmem, size = 0x20000, scoped, tag = 'input window, operand 1, single buffered']
    #allocation7 [shape = 's32[1]{0}', space=sflag, size = 0x4, scoped, tag = 'scoped memory for tpu_custom_call.1']
    #allocation8 [shape = 'u8[1024]{0}', space=vmem, size = 0x400, scoped, tag = 'output window, operand 0, single buffered']
    %8 = vsyncpa [#allocation4], 0
    %9 = vsyncpa [#allocation7], 0
    %10 = vsyncpa [#allocation5], 0
    // Predicated region
    $region2: #{tpu_custom_call.1} parent=1 // pred_check
      _
    $region3: #{tpu_custom_call.1} parent=1 // pred_check_branch
      %12 = sbr.rel (0) target = $region5
    $region4: #{tpu_custom_call.1} parent=1 // pred_region
      %s14 = ssub.s32 512, 512
      %15 = vsyncadd [#allocation4], %s14
      %s16 = sshll.u32 [#allocation3], 4
      %s17 = int_to_ptr.vmem [resolvable:$true] %s16
      %22 = dma.hbm_to_vmem [thread:$0]  %s0, 512, %s17, [#allocation4], 64, 64, 4
    $region5: #{tpu_custom_call.1} parent=1 // pred_fallthru
      _
    // Predicated region
    $region6: #{tpu_custom_call.1} parent=1 // pred_check
      _
    $region7: #{tpu_custom_call.1} parent=1 // pred_check_branch
      %24 = sbr.rel (0) target = $region9
    $region8: #{tpu_custom_call.1} parent=1 // pred_region
      %s26 = ssub.s32 4096, 4096
      %27 = vsyncadd [#allocation7], %s26
      %s28 = sshll.u32 [#allocation6], 4
      %s29 = int_to_ptr.vmem [resolvable:$true] %s28
      %34 = dma.hbm_to_vmem [thread:$0]  %s1, 4096, %s29, [#allocation7], 128, 128, 8
    $region9: #{tpu_custom_call.1} parent=1 // pred_fallthru
      _
    // Predicated region
    $region10: #{tpu_custom_call.1} parent=1 // pred_check
      _
    $region11: #{tpu_custom_call.1} parent=1 // pred_check_branch
      %36 = sbr.rel (0) target = $region13
    $region12: #{tpu_custom_call.1} parent=1 // pred_region
      _
    $region13: #{tpu_custom_call.1} parent=1 // pred_fallthru
      _
    // Predicated region
    $region14: #{tpu_custom_call.1} parent=1 // pred_check
      _
    $region15: #{tpu_custom_call.1} parent=1 // pred_check_branch
      %38 = sbr.rel (0) target = $region17
    $region16: #{tpu_custom_call.1} parent=1 // pred_region
      %39 = dma.done [#allocation4], 512
    $region17: #{tpu_custom_call.1} parent=1 // pred_fallthru
      _
    // Predicated region
    $region18: #{tpu_custom_call.1} parent=1 // pred_check
      _
    $region19: #{tpu_custom_call.1} parent=1 // pred_check_branch
      %41 = sbr.rel (0) target = $region21
    $region20: #{tpu_custom_call.1} parent=1 // pred_region
      %42 = dma.done [#allocation7], 4096
    $region21: #{tpu_custom_call.1} parent=1 // pred_fallthru
      _
    %p43 = scmp.eq.s32.totalorder 0, 0
    // Predicated region
    $region22: #{tpu_custom_call.1} parent=1 // pred_check
      %p44 = pneg %p43
    $region23: #{tpu_custom_call.1} parent=1 // pred_check_branch
      %46 = sbr.rel (%p44) target = $region25
    $region24: #{tpu_custom_call.1} parent=1 // pred_region
      %vm47 = vcmask 519168
      %48 = vst.msk [vmem:[#allocation2] sm:$0xf] %vm47, 0.0
      %49 = vst.msk [vmem:[#allocation2 + $0x4] sm:$0xf] %vm47, 0.0
    $region25: #{tpu_custom_call.1} parent=1 // pred_fallthru
      _
    %v50 = vld [vmem:[#allocation2] sm:$0xf]
    %v51 = vld [vmem:[#allocation2 + $0x4] sm:$0xf]
    %v52 = vld [vmem:[#allocation3] sm:$0xf]
    %v53 = vld [vmem:[#allocation3 + $0x4] sm:$0xf]
    %v54 = vld [vmem:[#allocation3 + $0x8] sm:$0xf]
    %v55 = vld [vmem:[#allocation3 + $0xc] sm:$0xf]
    %v56 = vld [vmem:[#allocation3 + $0x10] sm:$0xf]
    %v57 = vld [vmem:[#allocation3 + $0x14] sm:$0xf]
    %v58 = vld [vmem:[#allocation3 + $0x18] sm:$0xf]
    %v59 = vld [vmem:[#allocation3 + $0x1c] sm:$0xf]
    %vm60 = vcmask 519168
    %v61 = vsel %vm60, %v52, 0.0
    %v62 = vrot.slane %v61, 4
    %v63 = vadd.f32 %v61, %v62
    %v64 = vrot.slane %v63, 2
    %v65 = vadd.f32 %v63, %v64
    %v66 = vrot.slane %v65, 1
    %v67 = vadd.f32 %v65, %v66
    %v68 = vsel %vm60, %v53, 0.0
    %v69 = vrot.slane %v68, 4
    %v70 = vadd.f32 %v68, %v69
    %v71 = vrot.slane %v70, 2
    %v72 = vadd.f32 %v70, %v71
    %v73 = vrot.slane %v72, 1
    %v74 = vadd.f32 %v72, %v73
    %v75 = vsel %vm60, %v54, 0.0
    %v76 = vrot.slane %v75, 4
    %v77 = vadd.f32 %v75, %v76
    %v78 = vrot.slane %v77, 2
    %v79 = vadd.f32 %v77, %v78
    %v80 = vrot.slane %v79, 1
    %v81 = vadd.f32 %v79, %v80
    %v82 = vsel %vm60, %v55, 0.0
    %v83 = vrot.slane %v82, 4
    %v84 = vadd.f32 %v82, %v83
    %v85 = vrot.slane %v84, 2
    %v86 = vadd.f32 %v84, %v85
    %v87 = vrot.slane %v86, 1
    %v88 = vadd.f32 %v86, %v87
    %v89 = vsel %vm60, %v56, 0.0
    %v90 = vrot.slane %v89, 4
    %v91 = vadd.f32 %v89, %v90
    %v92 = vrot.slane %v91, 2
    %v93 = vadd.f32 %v91, %v92
    %v94 = vrot.slane %v93, 1
    %v95 = vadd.f32 %v93, %v94
    %v96 = vsel %vm60, %v57, 0.0
    %v97 = vrot.slane %v96, 4
    %v98 = vadd.f32 %v96, %v97
    %v99 = vrot.slane %v98, 2
    %v100 = vadd.f32 %v98, %v99
    %v101 = vrot.slane %v100, 1
    %v102 = vadd.f32 %v100, %v101
    %v103 = vsel %vm60, %v58, 0.0
    %v104 = vrot.slane %v103, 4
    %v105 = vadd.f32 %v103, %v104
    %v106 = vrot.slane %v105, 2
    %v107 = vadd.f32 %v105, %v106
    %v108 = vrot.slane %v107, 1
    %v109 = vadd.f32 %v107, %v108
    %v110 = vsel %vm60, %v59, 0.0
    %v111 = vrot.slane %v110, 4
    %v112 = vadd.f32 %v110, %v111
    %v113 = vrot.slane %v112, 2
    %v114 = vadd.f32 %v112, %v113
    %v115 = vrot.slane %v114, 1
    %v116 = vadd.f32 %v114, %v115
    %vm125 = vcmask 1041409
    %v126 = vsel %vm125, %v74, %v67
    %vm127 = vcmask 1042434
    %v128 = vsel %vm127, %v81, %v126
    %vm129 = vcmask 1043459
    %v130 = vsel %vm129, %v88, %v128
    %v131 = vsel %vm125, %v102, %v95
    %v132 = vsel %vm127, %v109, %v131
    %v133 = vsel %vm129, %v116, %v132
    %v136 = vadd.f32 %v50, %v130
    %v137 = vadd.f32 %v51, %v133
    %138 = vst.msk [vmem:[#allocation2] sm:$0xf] %vm60, %v136
    %139 = vst.msk [vmem:[#allocation2 + $0x4] sm:$0xf] %vm60, %v137
    // Predicated region
    $region26: #{tpu_custom_call.1} parent=1 // pred_check
      %p140 = pneg %p43
    $region27: #{tpu_custom_call.1} parent=1 // pred_check_branch
      %142 = sbr.rel (%p140) target = $region29
    $region28: #{tpu_custom_call.1} parent=1 // pred_region
      %v143 = vld [vmem:[#allocation2] sm:$0xf]
      %v144 = vld [vmem:[#allocation2 + $0x4] sm:$0xf]
      %v145 = vmul.f32 %v143, 0.0625
      %v146 = vmul.f32 %v144, 0.0625
      %v147 = vld [vmem:[#allocation6] sm:$0xff]
      %v148 = vld [vmem:[#allocation6 + $0x8] sm:$0xff]
      %v149 = vld [vmem:[#allocation6 + $0x10] sm:$0xff]
      %v150 = vld [vmem:[#allocation6 + $0x18] sm:$0xff]
      %v151 = vld [vmem:[#allocation6 + $0x20] sm:$0xff]
      %v152 = vld [vmem:[#allocation6 + $0x28] sm:$0xff]
      %v153 = vld [vmem:[#allocation6 + $0x30] sm:$0xff]
      %v154 = vld [vmem:[#allocation6 + $0x38] sm:$0xff]
      %s155 = scalar_lea.vmem [#allocation6], 64
      %v156 = vld [vmem:[%s155] sm:$0xff]
      %v157 = vld [vmem:[%s155 + $0x8] sm:$0xff]
      %v158 = vld [vmem:[%s155 + $0x10] sm:$0xff]
      %v159 = vld [vmem:[%s155 + $0x18] sm:$0xff]
      %v160 = vld [vmem:[%s155 + $0x20] sm:$0xff]
      %v161 = vld [vmem:[%s155 + $0x28] sm:$0xff]
      %v162 = vld [vmem:[%s155 + $0x30] sm:$0xff]
      %v163 = vld [vmem:[%s155 + $0x38] sm:$0xff]
      %v166 = vrot.slane %v145, 1
      %v167 = vsel %vm125, %v146, %v166
      %vm168 = vcmask 523264
      %v169 = vsel %vm168, %v167, 0
      %171 = vmatprep.subr.mxu0 0.0
      %172 = vmatpush1.msra.mxu0 0.0
      %173 = vmatprep.subr.mxu0 0.0
      %174 = vmatpush1.msra.mxu0 0.0
      %175 = vmatprep.subr.mxu0 0.0
      %176 = vmatpush1.msra.mxu0 0.0
      %177 = vmatprep.subr.mxu0 0.0
      %178 = vmatpush1.msra.mxu0 0.0
      %179 = vmatprep.subr.mxu0 0.0
      %180 = vmatpush1.msra.mxu0 0.0
      %181 = vmatprep.subr.mxu0 0.0
      %182 = vmatpush1.msra.mxu0 0.0
      %183 = vmatprep.subr.mxu0 0.0
      %184 = vmatpush1.msra.mxu0 0.0
      %185 = vmatprep.subr.mxu0 0.0
      %186 = vmatpush1.msra.mxu0 0.0
      %187 = vmatprep.subr.mxu0 0.0
      %188 = vmatpush1.msra.mxu0 %v163
      %189 = vmatprep.subr.mxu0 0.0
      %190 = vmatpush1.msra.mxu0 %v162
      %191 = vmatprep.subr.mxu0 0.0
      %192 = vmatpush1.msra.mxu0 %v161
      %193 = vmatprep.subr.mxu0 0.0
      %194 = vmatpush1.msra.mxu0 %v160
      %195 = vmatprep.subr.mxu0 0.0
      %196 = vmatpush1.msra.mxu0 %v159
      %197 = vmatprep.subr.mxu0 0.0
      %198 = vmatpush1.msra.mxu0 %v158
      %199 = vmatprep.subr.mxu0 0.0
      %200 = vmatpush1.msra.mxu0 %v157
      %201 = vmatprep.subr.mxu0 0.0
      %202 = vmatpush1.msra.mxu0 %v156
      %203 = vmatprep.subr.mxu0 0.0
      %204 = vmatpush2.msra.mxu0 0.0
      %205 = vmatprep.subr.mxu0 0.0
      %206 = vmatpush2.msra.mxu0 0.0
      %207 = vmatprep.subr.mxu0 0.0
      %208 = vmatpush2.msra.mxu0 0.0
      %209 = vmatprep.subr.mxu0 0.0
      %210 = vmatpush2.msra.mxu0 0.0
      %211 = vmatprep.subr.mxu0 0.0
      %212 = vmatpush2.msra.mxu0 0.0
      %213 = vmatprep.subr.mxu0 0.0
      %214 = vmatpush2.msra.mxu0 0.0
      %215 = vmatprep.subr.mxu0 0.0
      %216 = vmatpush2.msra.mxu0 0.0
      %217 = vmatprep.subr.mxu0 0.0
      %218 = vmatpush2.msra.mxu0 0.0
      %219 = vmatprep.subr.mxu0 0.0
      %220 = vmatpush2.msra.mxu0 0.0
      %221 = vmatprep.subr.mxu0 0.0
      %222 = vmatpush2.msra.mxu0 0.0
      %223 = vmatprep.subr.mxu0 0.0
      %224 = vmatpush2.msra.mxu0 0.0
      %225 = vmatprep.subr.mxu0 0.0
      %226 = vmatpush2.msra.mxu0 0.0
      %227 = vmatprep.subr.mxu0 0.0
      %228 = vmatpush2.msra.mxu0 0.0
      %229 = vmatprep.subr.mxu0 0.0
      %230 = vmatpush2.msra.mxu0 0.0
      %231 = vmatprep.subr.mxu0 0.0
      %232 = vmatpush2.msra.mxu0 0.0
      %233 = vmatprep.subr.mxu0 0.0
      %234 = vmatpush2.msra.mxu0 0.0
      %235 = vmatprep.mubr.f32.mxu0 0.0
      %236 = vmatmul.mubr.f32.gmra.mxu0 %v169
      %v237 = vpop.f32.mrf.mxu0
      %v238 = vadd.f32 0.0, %v237
      %v239 = vpop.f32.mrf.mxu0
      %240 = vdwg.mxu0
      %v241 = vrot.slane %v146, 7
      %v242 = vsel %vm125, %v241, %v145
      %v243 = vsel %vm168, %v242, 0
      %245 = vmatprep.subr.mxu0 0.0
      %246 = vmatpush1.msra.mxu0 0.0
      %247 = vmatprep.subr.mxu0 0.0
      %248 = vmatpush1.msra.mxu0 0.0
      %249 = vmatprep.subr.mxu0 0.0
      %250 = vmatpush1.msra.mxu0 0.0
      %251 = vmatprep.subr.mxu0 0.0
      %252 = vmatpush1.msra.mxu0 0.0
      %253 = vmatprep.subr.mxu0 0.0
      %254 = vmatpush1.msra.mxu0 0.0
      %255 = vmatprep.subr.mxu0 0.0
      %256 = vmatpush1.msra.mxu0 0.0
      %257 = vmatprep.subr.mxu0 0.0
      %258 = vmatpush1.msra.mxu0 0.0
      %259 = vmatprep.subr.mxu0 0.0
      %260 = vmatpush1.msra.mxu0 0.0
      %261 = vmatprep.subr.mxu0 0.0
      %262 = vmatpush1.msra.mxu0 %v154
      %263 = vmatprep.subr.mxu0 0.0
      %264 = vmatpush1.msra.mxu0 %v153
      %265 = vmatprep.subr.mxu0 0.0
      %266 = vmatpush1.msra.mxu0 %v152
      %267 = vmatprep.subr.mxu0 0.0
      %268 = vmatpush1.msra.mxu0 %v151
      %269 = vmatprep.subr.mxu0 0.0
      %270 = vmatpush1.msra.mxu0 %v150
      %271 = vmatprep.subr.mxu0 0.0
      %272 = vmatpush1.msra.mxu0 %v149
      %273 = vmatprep.subr.mxu0 0.0
      %274 = vmatpush1.msra.mxu0 %v148
      %275 = vmatprep.subr.mxu0 0.0
      %276 = vmatpush1.msra.mxu0 %v147
      %277 = vmatprep.subr.mxu0 0.0
      %278 = vmatpush2.msra.mxu0 0.0
      %279 = vmatprep.subr.mxu0 0.0
      %280 = vmatpush2.msra.mxu0 0.0
      %281 = vmatprep.subr.mxu0 0.0
      %282 = vmatpush2.msra.mxu0 0.0
      %283 = vmatprep.subr.mxu0 0.0
      %284 = vmatpush2.msra.mxu0 0.0
      %285 = vmatprep.subr.mxu0 0.0
      %286 = vmatpush2.msra.mxu0 0.0
      %287 = vmatprep.subr.mxu0 0.0
      %288 = vmatpush2.msra.mxu0 0.0
      %289 = vmatprep.subr.mxu0 0.0
      %290 = vmatpush2.msra.mxu0 0.0
      %291 = vmatprep.subr.mxu0 0.0
      %292 = vmatpush2.msra.mxu0 0.0
      %293 = vmatprep.subr.mxu0 0.0
      %294 = vmatpush2.msra.mxu0 0.0
      %295 = vmatprep.subr.mxu0 0.0
      %296 = vmatpush2.msra.mxu0 0.0
      %297 = vmatprep.subr.mxu0 0.0
      %298 = vmatpush2.msra.mxu0 0.0
      %299 = vmatprep.subr.mxu0 0.0
      %300 = vmatpush2.msra.mxu0 0.0
      %301 = vmatprep.subr.mxu0 0.0
      %302 = vmatpush2.msra.mxu0 0.0
      %303 = vmatprep.subr.mxu0 0.0
      %304 = vmatpush2.msra.mxu0 0.0
      %305 = vmatprep.subr.mxu0 0.0
      %306 = vmatpush2.msra.mxu0 0.0
      %307 = vmatprep.subr.mxu0 0.0
      %308 = vmatpush2.msra.mxu0 0.0
      %309 = vmatprep.mubr.f32.mxu0 0.0
      %310 = vmatmul.mubr.f32.gmra.mxu0 %v243
      %v311 = vpop.f32.mrf.mxu0
      %v312 = vadd.f32 %v238, %v311
      %v313 = vpop.f32.mrf.mxu0
      %314 = vdwg.mxu0
      %s315 = scalar_lea.vmem [#allocation6], 128
      %v316 = vld [vmem:[%s315] sm:$0xff]
      %v317 = vld [vmem:[%s315 + $0x8] sm:$0xff]
      %v318 = vld [vmem:[%s315 + $0x10] sm:$0xff]
      %v319 = vld [vmem:[%s315 + $0x18] sm:$0xff]
      %v320 = vld [vmem:[%s315 + $0x20] sm:$0xff]
      %v321 = vld [vmem:[%s315 + $0x28] sm:$0xff]
      %v322 = vld [vmem:[%s315 + $0x30] sm:$0xff]
      %v323 = vld [vmem:[%s315 + $0x38] sm:$0xff]
      %v324 = vrot.slane %v145, 2
      %v325 = vrot.slane %v146, 1
      %v326 = vsel %vm125, %v325, %v324
      %v327 = vsel %vm168, %v326, 0
      %329 = vmatprep.subr.mxu0 0.0
      %330 = vmatpush1.msra.mxu0 0.0
      %331 = vmatprep.subr.mxu0 0.0
      %332 = vmatpush1.msra.mxu0 0.0
      %333 = vmatprep.subr.mxu0 0.0
      %334 = vmatpush1.msra.mxu0 0.0
      %335 = vmatprep.subr.mxu0 0.0
      %336 = vmatpush1.msra.mxu0 0.0
      %337 = vmatprep.subr.mxu0 0.0
      %338 = vmatpush1.msra.mxu0 0.0
      %339 = vmatprep.subr.mxu0 0.0
      %340 = vmatpush1.msra.mxu0 0.0
      %341 = vmatprep.subr.mxu0 0.0
      %342 = vmatpush1.msra.mxu0 0.0
      %343 = vmatprep.subr.mxu0 0.0
      %344 = vmatpush1.msra.mxu0 0.0
      %345 = vmatprep.subr.mxu0 0.0
      %346 = vmatpush1.msra.mxu0 %v323
      %347 = vmatprep.subr.mxu0 0.0
      %348 = vmatpush1.msra.mxu0 %v322
      %349 = vmatprep.subr.mxu0 0.0
      %350 = vmatpush1.msra.mxu0 %v321
      %351 = vmatprep.subr.mxu0 0.0
      %352 = vmatpush1.msra.mxu0 %v320
      %353 = vmatprep.subr.mxu0 0.0
      %354 = vmatpush1.msra.mxu0 %v319
      %355 = vmatprep.subr.mxu0 0.0
      %356 = vmatpush1.msra.mxu0 %v318
      %357 = vmatprep.subr.mxu0 0.0
      %358 = vmatpush1.msra.mxu0 %v317
      %359 = vmatprep.subr.mxu0 0.0
      %360 = vmatpush1.msra.mxu0 %v316
      %361 = vmatprep.subr.mxu0 0.0
      %362 = vmatpush2.msra.mxu0 0.0
      %363 = vmatprep.subr.mxu0 0.0
      %364 = vmatpush2.msra.mxu0 0.0
      %365 = vmatprep.subr.mxu0 0.0
      %366 = vmatpush2.msra.mxu0 0.0
      %367 = vmatprep.subr.mxu0 0.0
      %368 = vmatpush2.msra.mxu0 0.0
      %369 = vmatprep.subr.mxu0 0.0
      %370 = vmatpush2.msra.mxu0 0.0
      %371 = vmatprep.subr.mxu0 0.0
      %372 = vmatpush2.msra.mxu0 0.0
      %373 = vmatprep.subr.mxu0 0.0
      %374 = vmatpush2.msra.mxu0 0.0
      %375 = vmatprep.subr.mxu0 0.0
      %376 = vmatpush2.msra.mxu0 0.0
      %377 = vmatprep.subr.mxu0 0.0
      %378 = vmatpush2.msra.mxu0 0.0
      %379 = vmatprep.subr.mxu0 0.0
      %380 = vmatpush2.msra.mxu0 0.0
      %381 = vmatprep.subr.mxu0 0.0
      %382 = vmatpush2.msra.mxu0 0.0
      %383 = vmatprep.subr.mxu0 0.0
      %384 = vmatpush2.msra.mxu0 0.0
      %385 = vmatprep.subr.mxu0 0.0
      %386 = vmatpush2.msra.mxu0 0.0
      %387 = vmatprep.subr.mxu0 0.0
      %388 = vmatpush2.msra.mxu0 0.0
      %389 = vmatprep.subr.mxu0 0.0
      %390 = vmatpush2.msra.mxu0 0.0
      %391 = vmatprep.subr.mxu0 0.0
      %392 = vmatpush2.msra.mxu0 0.0
      %393 = vmatprep.mubr.f32.mxu0 0.0
      %394 = vmatmul.mubr.f32.gmra.mxu0 %v327
      %v395 = vpop.f32.mrf.mxu0
      %v396 = vadd.f32 0.0, %v395
      %v397 = vpop.f32.mrf.mxu0
      %398 = vdwg.mxu0
      %v399 = vadd.f32 %v312, %v396
      %s400 = scalar_lea.vmem [#allocation6], 192
      %v401 = vld [vmem:[%s400] sm:$0xff]
      %v402 = vld [vmem:[%s400 + $0x8] sm:$0xff]
      %v403 = vld [vmem:[%s400 + $0x10] sm:$0xff]
      %v404 = vld [vmem:[%s400 + $0x18] sm:$0xff]
      %v405 = vld [vmem:[%s400 + $0x20] sm:$0xff]
      %v406 = vld [vmem:[%s400 + $0x28] sm:$0xff]
      %v407 = vld [vmem:[%s400 + $0x30] sm:$0xff]
      %v408 = vld [vmem:[%s400 + $0x38] sm:$0xff]
      %v409 = vrot.slane %v145, 3
      %v410 = vrot.slane %v146, 2
      %v411 = vsel %vm125, %v410, %v409
      %v412 = vsel %vm168, %v411, 0
      %414 = vmatprep.subr.mxu0 0.0
      %415 = vmatpush1.msra.mxu0 0.0
      %416 = vmatprep.subr.mxu0 0.0
      %417 = vmatpush1.msra.mxu0 0.0
      %418 = vmatprep.subr.mxu0 0.0
      %419 = vmatpush1.msra.mxu0 0.0
      %420 = vmatprep.subr.mxu0 0.0
      %421 = vmatpush1.msra.mxu0 0.0
      %422 = vmatprep.subr.mxu0 0.0
      %423 = vmatpush1.msra.mxu0 0.0
      %424 = vmatprep.subr.mxu0 0.0
      %425 = vmatpush1.msra.mxu0 0.0
      %426 = vmatprep.subr.mxu0 0.0
      %427 = vmatpush1.msra.mxu0 0.0
      %428 = vmatprep.subr.mxu0 0.0
      %429 = vmatpush1.msra.mxu0 0.0
      %430 = vmatprep.subr.mxu0 0.0
      %431 = vmatpush1.msra.mxu0 %v408
      %432 = vmatprep.subr.mxu0 0.0
      %433 = vmatpush1.msra.mxu0 %v407
      %434 = vmatprep.subr.mxu0 0.0
      %435 = vmatpush1.msra.mxu0 %v406
      %436 = vmatprep.subr.mxu0 0.0
      %437 = vmatpush1.msra.mxu0 %v405
      %438 = vmatprep.subr.mxu0 0.0
      %439 = vmatpush1.msra.mxu0 %v404
      %440 = vmatprep.subr.mxu0 0.0
      %441 = vmatpush1.msra.mxu0 %v403
      %442 = vmatprep.subr.mxu0 0.0
      %443 = vmatpush1.msra.mxu0 %v402
      %444 = vmatprep.subr.mxu0 0.0
      %445 = vmatpush1.msra.mxu0 %v401
      %446 = vmatprep.subr.mxu0 0.0
      %447 = vmatpush2.msra.mxu0 0.0
      %448 = vmatprep.subr.mxu0 0.0
      %449 = vmatpush2.msra.mxu0 0.0
      %450 = vmatprep.subr.mxu0 0.0
      %451 = vmatpush2.msra.mxu0 0.0
      %452 = vmatprep.subr.mxu0 0.0
      %453 = vmatpush2.msra.mxu0 0.0
      %454 = vmatprep.subr.mxu0 0.0
      %455 = vmatpush2.msra.mxu0 0.0
      %456 = vmatprep.subr.mxu0 0.0
      %457 = vmatpush2.msra.mxu0 0.0
      %458 = vmatprep.subr.mxu0 0.0
      %459 = vmatpush2.msra.mxu0 0.0
      %460 = vmatprep.subr.mxu0 0.0
      %461 = vmatpush2.msra.mxu0 0.0
      %462 = vmatprep.subr.mxu0 0.0
      %463 = vmatpush2.msra.mxu0 0.0
      %464 = vmatprep.subr.mxu0 0.0
      %465 = vmatpush2.msra.mxu0 0.0
      %466 = vmatprep.subr.mxu0 0.0
      %467 = vmatpush2.msra.mxu0 0.0
      %468 = vmatprep.subr.mxu0 0.0
      %469 = vmatpush2.msra.mxu0 0.0
      %470 = vmatprep.subr.mxu0 0.0
      %471 = vmatpush2.msra.mxu0 0.0
      %472 = vmatprep.subr.mxu0 0.0
      %473 = vmatpush2.msra.mxu0 0.0
      %474 = vmatprep.subr.mxu0 0.0
      %475 = vmatpush2.msra.mxu0 0.0
      %476 = vmatprep.subr.mxu0 0.0
      %477 = vmatpush2.msra.mxu0 0.0
      %478 = vmatprep.mubr.f32.mxu0 0.0
      %479 = vmatmul.mubr.f32.gmra.mxu0 %v412
      %v480 = vpop.f32.mrf.mxu0
      %v481 = vadd.f32 0.0, %v480
      %v482 = vpop.f32.mrf.mxu0
      %483 = vdwg.mxu0
      %v484 = vadd.f32 %v399, %v481
      %v485 = vld [vmem:[%s2] sm:$0x1]
      %v487 = vlaneseq
      %v488 = vshrl.u32 %v487, 7
      %v489 = vsub.s32 0, %v488
      %v490 = vrot.slane %v485, %v489
      %v492 = vadd.f32 %v484, %v490
      %493 = vst [vmem:[#allocation8] sm:$0x3] %v492
    $region29: #{tpu_custom_call.1} parent=1 // pred_fallthru
      _
    // Predicated region
    $region30: #{tpu_custom_call.1} parent=1 // pred_check
      _
    $region31: #{tpu_custom_call.1} parent=1 // pred_check_branch
      %495 = sbr.rel (0) target = $region33
    $region32: #{tpu_custom_call.1} parent=1 // pred_region
      %s497 = ssub.s32 32, 32
      %498 = vsyncadd [#allocation5], %s497
      %s500 = sshll.u32 [#allocation8], 4
      %s501 = int_to_ptr.vmem [resolvable:$true] %s500
      %503 = dma.vmem_to_hbm [thread:$0]  %s501, 32, %s3, [#allocation5]
    $region33: #{tpu_custom_call.1} parent=1 // pred_fallthru
      _
    // Predicated region
    $region34: #{tpu_custom_call.1} parent=1 // pred_check
      _
    $region35: #{tpu_custom_call.1} parent=1 // pred_check_branch
      %505 = sbr.rel (0) target = $region37
    $region36: #{tpu_custom_call.1} parent=1 // pred_region
      %506 = dma.done [#allocation5], 32
    $region37: #{tpu_custom_call.1} parent=1 // pred_fallthru
      _
    %507 = vsyncpa [#allocation4], 1
    %508 = vsyncpa [#allocation7], 1
    %509 = vsyncpa [#allocation5], 1

</llo_original>
